<compile_context>
chip_gen: v7x
topology: tpu7x:2x2x1
jax: 0.10.0
libtpu: 0.0.40
codegen_flags: <defaults>
</compile_context>

<pallas_src>
import functools
import math

import jax
import jax.numpy as jnp
from jax import lax
from jax.experimental import pallas as pl
from jax.experimental.pallas import tpu as pltpu


def _round_up(x, m):
    return ((x + m - 1) // m) * m


def _gemm_bias_kernel(p_ref, w_ref, b_ref, o_ref):
    # p_ref: (M_TILE, 9*Cin)   im2col patch rows
    # w_ref: (9*Cin, COUT_PAD) flattened conv weights (zero-padded channels)
    # b_ref: (1, COUT_PAD)     bias (zero-padded channels)
    # o_ref: (M_TILE, COUT_PAD)
    acc = jnp.dot(p_ref[...], w_ref[...], preferred_element_type=jnp.float32)
    acc = acc + b_ref[...].astype(jnp.float32)
    o_ref[...] = acc.astype(o_ref.dtype)


def output_proj_forward(x, weight, bias):
    """Pallas implementation of OutputProj.forward.

    x      : (B, L, C)   with L = H*W (square spatial grid), C == in_channel
    weight : (Cout, Cin, 3, 3)  (PyTorch OIHW layout)
    bias   : (Cout,)
    returns: (B, Cout, H, W)    (NCHW, matching the PyTorch module)
    """
    B, L, Cin = x.shape
    H = math.isqrt(L)
    W = H
    assert H * W == L, f"L={L} is not a perfect square"
    Cout = weight.shape[0]

    K = 9 * Cin
    COUT_PAD = _round_up(Cout, 128)

    # ---- wrapper-side plumbing (plain JAX, tiny shapes) ------------------
    # tokens -> NHWC image, pad the halo, build im2col patches (B*H*W, 9*Cin)
    x_nhwc = x.reshape(B, H, W, Cin)
    x_pad = jnp.pad(x_nhwc, ((0, 0), (1, 1), (1, 1), (0, 0)))
    patches = jnp.concatenate(
        [x_pad[:, dh:dh + H, dw:dw + W, :] for dh in range(3) for dw in range(3)],
        axis=-1,
    ).reshape(B * H * W, K)

    # OIHW -> HWIO -> (9*Cin, Cout), zero-padded on the output-channel axis so
    # the kernel's matmul / stores are lane-dense (multiple of 128).
    w_hwio = jnp.transpose(weight, (2, 3, 1, 0)).reshape(K, Cout)
    w_slab = jnp.zeros((K, COUT_PAD), dtype=weight.dtype).at[:, :Cout].set(w_hwio)
    b_slab = jnp.zeros((1, COUT_PAD), dtype=bias.dtype).at[0, :Cout].set(bias)

    # M tiling: whole batch folded into the GEMM M dimension.
    M = B * H * W
    M_TILE = min(512, _round_up(M, 128))
    M_pad = _round_up(M, M_TILE)
    if M_pad != M:
        patches = jnp.pad(patches, ((0, M_pad - M), (0, 0)))

    out2d = pl.pallas_call(
        _gemm_bias_kernel,
        out_shape=jax.ShapeDtypeStruct((M_pad, COUT_PAD), x.dtype),
        grid=(M_pad // M_TILE,),
        in_specs=[
            pl.BlockSpec((M_TILE, K), lambda i: (i, 0)),
            pl.BlockSpec((K, COUT_PAD), lambda i: (0, 0)),
            pl.BlockSpec((1, COUT_PAD), lambda i: (0, 0)),
        ],
        out_specs=pl.BlockSpec((M_TILE, COUT_PAD), lambda i: (i, 0)),
        compiler_params=pltpu.CompilerParams(
            dimension_semantics=("parallel",),
        ),
    )(patches, w_slab, b_slab)

    # Slice off the channel / row padding, then NHWC -> NCHW like PyTorch.
    out_nhwc = out2d[:M, :Cout].reshape(B, H, W, Cout)
    return jnp.transpose(out_nhwc, (0, 3, 1, 2))


def _reference_forward(x, weight, bias):
    """Pure-JAX reference (lax conv) mirroring the PyTorch forward."""
    B, L, Cin = x.shape
    H = W = math.isqrt(L)
    x_nchw = jnp.transpose(x, (0, 2, 1)).reshape(B, Cin, H, W)
    out = lax.conv_general_dilated(
        x_nchw, weight,
        window_strides=(1, 1), padding=((1, 1), (1, 1)),
        dimension_numbers=("NCHW", "OIHW", "NCHW"),
    )
    return out + bias.reshape(1, -1, 1, 1)


if __name__ == "__main__":
    # Module defaults: in_channel=64, out_channel=3, kernel_size=3, stride=1,
    # no activation / norm.  Small spatial grid: H = W = 8 -> L = 64.
    B, H, W = 2, 8, 8
    Cin, Cout = 64, 3
    L = H * W

    key = jax.random.PRNGKey(0)
    kx, kw, kb = jax.random.split(key, 3)

    x = jax.random.normal(kx, (B, L, Cin), dtype=jnp.float32)

    # Deterministic parameter init mimicking PyTorch Conv2d defaults
    # (uniform in +/- 1/sqrt(fan_in), fan_in = Cin * 3 * 3).
    fan_in = Cin * 3 * 3
    bound = 1.0 / math.sqrt(fan_in)
    weight = jax.random.uniform(
        kw, (Cout, Cin, 3, 3), dtype=jnp.float32, minval=-bound, maxval=bound
    )
    bias = jax.random.uniform(
        kb, (Cout,), dtype=jnp.float32, minval=-bound, maxval=bound
    )

    out = output_proj_forward(x, weight, bias)
    out = jax.block_until_ready(out)

    ref = jax.block_until_ready(_reference_forward(x, weight, bias))
    assert out.shape == (B, Cout, H, W), out.shape
    assert jnp.allclose(out, ref, atol=1e-5, rtol=1e-5), "mismatch vs reference"

    print("KERNEL_OK")
</pallas_src>

<mosaic_0001>
module attributes {stable_mosaic.version = 11 : i64} {
  func.func @_gemm_bias_kernel(%arg0: i32, %arg1: memref<128x576xf32, #tpu.memory_space<vmem>>, %arg2: memref<576x128xf32, #tpu.memory_space<vmem>>, %arg3: memref<1x128xf32, #tpu.memory_space<vmem>>, %arg4: memref<128x128xf32, #tpu.memory_space<vmem>>) attributes {dimension_semantics = [#tpu.dimension_semantics<parallel>], iteration_bounds = array<i64: 1>, scalar_prefetch = 0 : i64, scratch_operands = 0 : i64, tpu.core_type = #tpu.core_type<tc>, window_params = [{transform_indices = @transform_0, window_bounds = array<i64: 128, 576>}, {pipeline_mode = #tpu.pipeline_mode<synchronous>, transform_indices = @transform_1, window_bounds = array<i64: 576, 128>}, {pipeline_mode = #tpu.pipeline_mode<synchronous>, transform_indices = @transform_2, window_bounds = array<i64: 1, 128>}, {transform_indices = @transform_3, window_bounds = array<i64: 128, 128>}]} {
    %c0 = arith.constant 0 : index
    %c0_0 = arith.constant 0 : index
    %0 = vector.load %arg1[%c0, %c0_0] : memref<128x576xf32, #tpu.memory_space<vmem>>, vector<128x576xf32>
    %c0_1 = arith.constant 0 : index
    %c0_2 = arith.constant 0 : index
    %1 = vector.load %arg2[%c0_1, %c0_2] : memref<576x128xf32, #tpu.memory_space<vmem>>, vector<576x128xf32>
    %cst = arith.constant dense<0.000000e+00> : vector<128x128xf32>
    %2 = tpu.matmul %0, %1, %cst {dimension_numbers = #tpu.dot_dimension_numbers<[1], [0], [0], [1], [0, 0, 1, 1], [], []>} : vector<128x576xf32>, vector<576x128xf32>, vector<128x128xf32> -> vector<128x128xf32>
    %c0_3 = arith.constant 0 : index
    %c0_4 = arith.constant 0 : index
    %3 = vector.load %arg3[%c0_3, %c0_4] : memref<1x128xf32, #tpu.memory_space<vmem>>, vector<1x128xf32>
    %4 = vector.broadcast %3 : vector<1x128xf32> to vector<128x128xf32>
    %5 = arith.addf %2, %4 : vector<128x128xf32>
    %c0_5 = arith.constant 0 : index
    %c0_6 = arith.constant 0 : index
    %6 = vector.load %arg4[%c0_5, %c0_6] : memref<128x128xf32, #tpu.memory_space<vmem>>, vector<128x128xf32>
    tpu.vector_store %arg4[%c0_5, %c0_6], %5 {strides = array<i32>} : memref<128x128xf32, #tpu.memory_space<vmem>>, vector<128x128xf32>,
    return
  }
  func.func @transform_0(%arg0: i32) -> (i32, i32) {
    %c0_i32 = arith.constant 0 : i32
    %c0_i32_0 = arith.constant 0 : i32
    return %arg0, %c0_i32 : i32, i32
  }
  func.func @transform_1(%arg0: i32) -> (i32, i32) {
    %c0_i32 = arith.constant 0 : i32
    %c0_i32_0 = arith.constant 0 : i32
    %c0_i32_1 = arith.constant 0 : i32
    return %c0_i32, %c0_i32_0 : i32, i32
  }
  func.func @transform_2(%arg0: i32) -> (i32, i32) {
    %c0_i32 = arith.constant 0 : i32
    %c0_i32_0 = arith.constant 0 : i32
    %c0_i32_1 = arith.constant 0 : i32
    return %c0_i32, %c0_i32_0 : i32, i32
  }
  func.func @transform_3(%arg0: i32) -> (i32, i32) {
    %c0_i32 = arith.constant 0 : i32
    %c0_i32_0 = arith.constant 0 : i32
    return %arg0, %c0_i32 : i32, i32
  }
}

</mosaic_0001>

<llo_original>
// kernel: tpu_custom_call.1
$region0: #{tpu_custom_call.1}
  #allocation0 [shape = 'u32[]', space=smem, size = 0x4, offset = 0x4, fixed_abs, tag = 'smem constant byte address 0x4 - core index']
  #allocation1 [shape = 'u32[144,128]{1,0:T(1,128)}', space=vmem, size = 0x12000, scoped, tag = 'internal scratch']
  %s0 = inlined_call_operand.vmem [shape: f32[128,576], index: 0, kind: input, shape index: {}]
  %s1 = inlined_call_operand.vmem [shape: f32[576,128], index: 1, kind: input, shape index: {}]
  %s2 = inlined_call_operand.vmem [shape: f32[1,128], index: 2, kind: input, shape index: {}]
  %s3 = inlined_call_operand.hbm [shape: f32[128,128], index: 3, kind: output, shape index: {}]
  %s4 = sld [smem:[#allocation0]]
  $region22: #{tpu_custom_call.1} parent=0
    _
  %s6 = ssub.s32 1, %s4
  %s7 = scalar_select 0, %s6, %s4
  $region1: #{tpu_custom_call.1} parent=0
    #allocation2 [shape = 'u8[65536]{0}', space=vmem, size = 0x10000, scoped, tag = 'output window, operand 0, single buffered']
    #allocation3 [shape = 's32[1]{0}', space=sflag, size = 0x4, scoped, tag = 'scoped memory for tpu_custom_call.1']
    %8 = vsyncpa [#allocation3], 0
    // Predicated region
    $region2: #{tpu_custom_call.1} parent=1 // pred_check
      _
    $region3: #{tpu_custom_call.1} parent=1 // pred_check_branch
      %10 = sbr.rel (0) target = $region5
    $region4: #{tpu_custom_call.1} parent=1 // pred_region
      _
    $region5: #{tpu_custom_call.1} parent=1 // pred_fallthru
      _
    // Predicated region
    $region6: #{tpu_custom_call.1} parent=1 // pred_check
      _
    $region7: #{tpu_custom_call.1} parent=1 // pred_check_branch
      %12 = sbr.rel (0) target = $region9
    $region8: #{tpu_custom_call.1} parent=1 // pred_region
      _
    $region9: #{tpu_custom_call.1} parent=1 // pred_fallthru
      _
    // Predicated region
    $region10: #{tpu_custom_call.1} parent=1 // pred_check
      _
    $region11: #{tpu_custom_call.1} parent=1 // pred_check_branch
      %14 = sbr.rel (0) target = $region13
    $region12: #{tpu_custom_call.1} parent=1 // pred_region
      _
    $region13: #{tpu_custom_call.1} parent=1 // pred_fallthru
      _
    %v15 = vld [vmem:[%s0] sm:$0xff]
    %v16 = vld [vmem:[%s0 + $0x8] sm:$0xff]
    %v17 = vld [vmem:[%s0 + $0x10] sm:$0xff]
    %v18 = vld [vmem:[%s0 + $0x18] sm:$0xff]
    %v19 = vld [vmem:[%s0 + $0x20] sm:$0xff]
    %v20 = vld [vmem:[%s0 + $0x28] sm:$0xff]
    %v21 = vld [vmem:[%s0 + $0x30] sm:$0xff]
    %v22 = vld [vmem:[%s0 + $0x38] sm:$0xff]
    %v23 = vld [vmem:[%s0 + $0x40] sm:$0xff]
    %v24 = vld [vmem:[%s0 + $0x48] sm:$0xff]
    %v25 = vld [vmem:[%s0 + $0x50] sm:$0xff]
    %v26 = vld [vmem:[%s0 + $0x58] sm:$0xff]
    %v27 = vld [vmem:[%s0 + $0x60] sm:$0xff]
    %v28 = vld [vmem:[%s0 + $0x68] sm:$0xff]
    %v29 = vld [vmem:[%s0 + $0x70] sm:$0xff]
    %v30 = vld [vmem:[%s0 + $0x78] sm:$0xff]
    %v31 = vld [vmem:[%s0 + $0x80] sm:$0xff]
    %v32 = vld [vmem:[%s0 + $0x88] sm:$0xff]
    %v33 = vld [vmem:[%s0 + $0x90] sm:$0xff]
    %v34 = vld [vmem:[%s0 + $0x98] sm:$0xff]
    %v35 = vld [vmem:[%s0 + $0xa0] sm:$0xff]
    %v36 = vld [vmem:[%s0 + $0xa8] sm:$0xff]
    %v37 = vld [vmem:[%s0 + $0xb0] sm:$0xff]
    %v38 = vld [vmem:[%s0 + $0xb8] sm:$0xff]
    %v39 = vld [vmem:[%s0 + $0xc0] sm:$0xff]
    %v40 = vld [vmem:[%s0 + $0xc8] sm:$0xff]
    %v41 = vld [vmem:[%s0 + $0xd0] sm:$0xff]
    %v42 = vld [vmem:[%s0 + $0xd8] sm:$0xff]
    %v43 = vld [vmem:[%s0 + $0xe0] sm:$0xff]
    %v44 = vld [vmem:[%s0 + $0xe8] sm:$0xff]
    %v45 = vld [vmem:[%s0 + $0xf0] sm:$0xff]
    %v46 = vld [vmem:[%s0 + $0xf8] sm:$0xff]
    %v47 = vld [vmem:[%s0 + $0x100] sm:$0xff]
    %v48 = vld [vmem:[%s0 + $0x108] sm:$0xff]
    %v49 = vld [vmem:[%s0 + $0x110] sm:$0xff]
    %v50 = vld [vmem:[%s0 + $0x118] sm:$0xff]
    %v51 = vld [vmem:[%s0 + $0x120] sm:$0xff]
    %v52 = vld [vmem:[%s0 + $0x128] sm:$0xff]
    %v53 = vld [vmem:[%s0 + $0x130] sm:$0xff]
    %v54 = vld [vmem:[%s0 + $0x138] sm:$0xff]
    %v55 = vld [vmem:[%s0 + $0x140] sm:$0xff]
    %v56 = vld [vmem:[%s0 + $0x148] sm:$0xff]
    %v57 = vld [vmem:[%s0 + $0x150] sm:$0xff]
    %v58 = vld [vmem:[%s0 + $0x158] sm:$0xff]
    %v59 = vld [vmem:[%s0 + $0x160] sm:$0xff]
    %v60 = vld [vmem:[%s0 + $0x168] sm:$0xff]
    %v61 = vld [vmem:[%s0 + $0x170] sm:$0xff]
    %v62 = vld [vmem:[%s0 + $0x178] sm:$0xff]
    %v63 = vld [vmem:[%s0 + $0x180] sm:$0xff]
    %v64 = vld [vmem:[%s0 + $0x188] sm:$0xff]
    %v65 = vld [vmem:[%s0 + $0x190] sm:$0xff]
    %v66 = vld [vmem:[%s0 + $0x198] sm:$0xff]
    %v67 = vld [vmem:[%s0 + $0x1a0] sm:$0xff]
    %v68 = vld [vmem:[%s0 + $0x1a8] sm:$0xff]
    %v69 = vld [vmem:[%s0 + $0x1b0] sm:$0xff]
    %v70 = vld [vmem:[%s0 + $0x1b8] sm:$0xff]
    %v71 = vld [vmem:[%s0 + $0x1c0] sm:$0xff]
    %v72 = vld [vmem:[%s0 + $0x1c8] sm:$0xff]
    %v73 = vld [vmem:[%s0 + $0x1d0] sm:$0xff]
    %v74 = vld [vmem:[%s0 + $0x1d8] sm:$0xff]
    %v75 = vld [vmem:[%s0 + $0x1e0] sm:$0xff]
    %v76 = vld [vmem:[%s0 + $0x1e8] sm:$0xff]
    %v77 = vld [vmem:[%s0 + $0x1f0] sm:$0xff]
    %v78 = vld [vmem:[%s0 + $0x1f8] sm:$0xff]
    %v79 = vld [vmem:[%s0 + $0x200] sm:$0xff]
    %v80 = vld [vmem:[%s0 + $0x208] sm:$0xff]
    %v81 = vld [vmem:[%s0 + $0x210] sm:$0xff]
    %v82 = vld [vmem:[%s0 + $0x218] sm:$0xff]
    %v83 = vld [vmem:[%s0 + $0x220] sm:$0xff]
    %v84 = vld [vmem:[%s0 + $0x228] sm:$0xff]
    %v85 = vld [vmem:[%s0 + $0x230] sm:$0xff]
    %v86 = vld [vmem:[%s0 + $0x238] sm:$0xff]
    %v87 = vld [vmem:[%s0 + $0x240] sm:$0xff]
    %v88 = vld [vmem:[%s0 + $0x248] sm:$0xff]
    %v89 = vld [vmem:[%s0 + $0x250] sm:$0xff]
    %v90 = vld [vmem:[%s0 + $0x258] sm:$0xff]
    %v91 = vld [vmem:[%s0 + $0x260] sm:$0xff]
    %v92 = vld [vmem:[%s0 + $0x268] sm:$0xff]
    %v93 = vld [vmem:[%s0 + $0x270] sm:$0xff]
    %v94 = vld [vmem:[%s0 + $0x278] sm:$0xff]
    %v95 = vld [vmem:[%s1] sm:$0xff]
    %v96 = vld [vmem:[%s1 + $0x8] sm:$0xff]
    %v97 = vld [vmem:[%s1 + $0x10] sm:$0xff]
    %v98 = vld [vmem:[%s1 + $0x18] sm:$0xff]
    %v99 = vld [vmem:[%s1 + $0x20] sm:$0xff]
    %v100 = vld [vmem:[%s1 + $0x28] sm:$0xff]
    %v101 = vld [vmem:[%s1 + $0x30] sm:$0xff]
    %v102 = vld [vmem:[%s1 + $0x38] sm:$0xff]
    %v103 = vld [vmem:[%s1 + $0x40] sm:$0xff]
    %v104 = vld [vmem:[%s1 + $0x48] sm:$0xff]
    %v105 = vld [vmem:[%s1 + $0x50] sm:$0xff]
    %v106 = vld [vmem:[%s1 + $0x58] sm:$0xff]
    %v107 = vld [vmem:[%s1 + $0x60] sm:$0xff]
    %v108 = vld [vmem:[%s1 + $0x68] sm:$0xff]
    %v109 = vld [vmem:[%s1 + $0x70] sm:$0xff]
    %v110 = vld [vmem:[%s1 + $0x78] sm:$0xff]
    %v111 = vld [vmem:[%s1 + $0x80] sm:$0xff]
    %v112 = vld [vmem:[%s1 + $0x88] sm:$0xff]
    %v113 = vld [vmem:[%s1 + $0x90] sm:$0xff]
    %v114 = vld [vmem:[%s1 + $0x98] sm:$0xff]
    %v115 = vld [vmem:[%s1 + $0xa0] sm:$0xff]
    %v116 = vld [vmem:[%s1 + $0xa8] sm:$0xff]
    %v117 = vld [vmem:[%s1 + $0xb0] sm:$0xff]
    %v118 = vld [vmem:[%s1 + $0xb8] sm:$0xff]
    %v119 = vld [vmem:[%s1 + $0xc0] sm:$0xff]
    %v120 = vld [vmem:[%s1 + $0xc8] sm:$0xff]
    %v121 = vld [vmem:[%s1 + $0xd0] sm:$0xff]
    %v122 = vld [vmem:[%s1 + $0xd8] sm:$0xff]
    %v123 = vld [vmem:[%s1 + $0xe0] sm:$0xff]
    %v124 = vld [vmem:[%s1 + $0xe8] sm:$0xff]
    %v125 = vld [vmem:[%s1 + $0xf0] sm:$0xff]
    %v126 = vld [vmem:[%s1 + $0xf8] sm:$0xff]
    %v127 = vld [vmem:[%s1 + $0x100] sm:$0xff]
    %v128 = vld [vmem:[%s1 + $0x108] sm:$0xff]
    %v129 = vld [vmem:[%s1 + $0x110] sm:$0xff]
    %v130 = vld [vmem:[%s1 + $0x118] sm:$0xff]
    %v131 = vld [vmem:[%s1 + $0x120] sm:$0xff]
    %v132 = vld [vmem:[%s1 + $0x128] sm:$0xff]
    %v133 = vld [vmem:[%s1 + $0x130] sm:$0xff]
    %v134 = vld [vmem:[%s1 + $0x138] sm:$0xff]
    %v135 = vld [vmem:[%s1 + $0x140] sm:$0xff]
    %v136 = vld [vmem:[%s1 + $0x148] sm:$0xff]
    %v137 = vld [vmem:[%s1 + $0x150] sm:$0xff]
    %v138 = vld [vmem:[%s1 + $0x158] sm:$0xff]
    %v139 = vld [vmem:[%s1 + $0x160] sm:$0xff]
    %v140 = vld [vmem:[%s1 + $0x168] sm:$0xff]
    %v141 = vld [vmem:[%s1 + $0x170] sm:$0xff]
    %v142 = vld [vmem:[%s1 + $0x178] sm:$0xff]
    %v143 = vld [vmem:[%s1 + $0x180] sm:$0xff]
    %v144 = vld [vmem:[%s1 + $0x188] sm:$0xff]
    %v145 = vld [vmem:[%s1 + $0x190] sm:$0xff]
    %v146 = vld [vmem:[%s1 + $0x198] sm:$0xff]
    %v147 = vld [vmem:[%s1 + $0x1a0] sm:$0xff]
    %v148 = vld [vmem:[%s1 + $0x1a8] sm:$0xff]
    %v149 = vld [vmem:[%s1 + $0x1b0] sm:$0xff]
    %v150 = vld [vmem:[%s1 + $0x1b8] sm:$0xff]
    %v151 = vld [vmem:[%s1 + $0x1c0] sm:$0xff]
    %v152 = vld [vmem:[%s1 + $0x1c8] sm:$0xff]
    %v153 = vld [vmem:[%s1 + $0x1d0] sm:$0xff]
    %v154 = vld [vmem:[%s1 + $0x1d8] sm:$0xff]
    %v155 = vld [vmem:[%s1 + $0x1e0] sm:$0xff]
    %v156 = vld [vmem:[%s1 + $0x1e8] sm:$0xff]
    %v157 = vld [vmem:[%s1 + $0x1f0] sm:$0xff]
    %v158 = vld [vmem:[%s1 + $0x1f8] sm:$0xff]
    %v159 = vld [vmem:[%s1 + $0x200] sm:$0xff]
    %v160 = vld [vmem:[%s1 + $0x208] sm:$0xff]
    %v161 = vld [vmem:[%s1 + $0x210] sm:$0xff]
    %v162 = vld [vmem:[%s1 + $0x218] sm:$0xff]
    %v163 = vld [vmem:[%s1 + $0x220] sm:$0xff]
    %v164 = vld [vmem:[%s1 + $0x228] sm:$0xff]
    %v165 = vld [vmem:[%s1 + $0x230] sm:$0xff]
    %v166 = vld [vmem:[%s1 + $0x238] sm:$0xff]
    %v167 = vld [vmem:[%s2] sm:$0x1]
    %v169 = vlaneseq
    %v170 = vshrl.u32 %v169, 7
    %v171 = vsub.s32 0, %v170
    %v172 = vrot.slane %v167, %v171
    %vm174 = vcmask 523264
    %v176 = vsel %vm174, %v19, 0
    %v179 = vsel %vm174, %v24, 0
    %v182 = vsel %vm174, %v29, 0
    %v185 = vsel %vm174, %v34, 0
    %v188 = vsel %vm174, %v39, 0
    %v191 = vsel %vm174, %v44, 0
    %v194 = vsel %vm174, %v49, 0
    %v197 = vsel %vm174, %v54, 0
    %v200 = vsel %vm174, %v59, 0
    %v203 = vsel %vm174, %v64, 0
    %v206 = vsel %vm174, %v69, 0
    %v209 = vsel %vm174, %v74, 0
    %v212 = vsel %vm174, %v79, 0
    %v215 = vsel %vm174, %v84, 0
    %v218 = vsel %vm174, %v89, 0
    %v221 = vsel %vm174, %v94, 0
    %223 = vmatprep.subr.mxu0 0.0
    %224 = vmatpush1.msra.mxu0 %v95
    %225 = vmatprep.subr.mxu0 0.0
    %226 = vmatpush1.msra.mxu0 %v96
    %227 = vmatprep.subr.mxu0 0.0
    %228 = vmatpush1.msra.mxu0 %v97
    %229 = vmatprep.subr.mxu0 0.0
    %230 = vmatpush1.msra.mxu0 %v98
    %231 = vmatprep.subr.mxu0 0.0
    %232 = vmatpush1.msra.mxu0 %v99
    %233 = vmatprep.subr.mxu0 0.0
    %234 = vmatpush1.msra.mxu0 %v100
    %235 = vmatprep.subr.mxu0 0.0
    %236 = vmatpush1.msra.mxu0 %v101
    %237 = vmatprep.subr.mxu0 0.0
    %238 = vmatpush1.msra.mxu0 %v102
    %239 = vmatprep.subr.mxu0 0.0
    %240 = vmatpush1.msra.mxu0 %v103
    %241 = vmatprep.subr.mxu0 0.0
    %242 = vmatpush1.msra.mxu0 %v104
    %243 = vmatprep.subr.mxu0 0.0
    %244 = vmatpush1.msra.mxu0 %v105
    %245 = vmatprep.subr.mxu0 0.0
    %246 = vmatpush1.msra.mxu0 %v106
    %247 = vmatprep.subr.mxu0 0.0
    %248 = vmatpush1.msra.mxu0 %v107
    %249 = vmatprep.subr.mxu0 0.0
    %250 = vmatpush1.msra.mxu0 %v108
    %251 = vmatprep.subr.mxu0 0.0
    %252 = vmatpush1.msra.mxu0 %v109
    %253 = vmatprep.subr.mxu0 0.0
    %254 = vmatpush1.msra.mxu0 %v110
    %255 = vmatprep.subr.mxu0 0.0
    %256 = vmatpush1.msra.mxu0 %v111
    %257 = vmatprep.subr.mxu0 0.0
    %258 = vmatpush1.msra.mxu0 %v112
    %259 = vmatprep.subr.mxu0 0.0
    %260 = vmatpush1.msra.mxu0 %v113
    %261 = vmatprep.subr.mxu0 0.0
    %262 = vmatpush1.msra.mxu0 %v114
    %263 = vmatprep.subr.mxu0 0.0
    %264 = vmatpush1.msra.mxu0 %v115
    %265 = vmatprep.subr.mxu0 0.0
    %266 = vmatpush1.msra.mxu0 %v116
    %267 = vmatprep.subr.mxu0 0.0
    %268 = vmatpush1.msra.mxu0 %v117
    %269 = vmatprep.subr.mxu0 0.0
    %270 = vmatpush1.msra.mxu0 %v118
    %271 = vmatprep.subr.mxu0 0.0
    %272 = vmatpush1.msra.mxu0 %v119
    %273 = vmatprep.subr.mxu0 0.0
    %274 = vmatpush1.msra.mxu0 %v120
    %275 = vmatprep.subr.mxu0 0.0
    %276 = vmatpush1.msra.mxu0 %v121
    %277 = vmatprep.subr.mxu0 0.0
    %278 = vmatpush1.msra.mxu0 %v122
    %279 = vmatprep.subr.mxu0 0.0
    %280 = vmatpush1.msra.mxu0 %v123
    %281 = vmatprep.subr.mxu0 0.0
    %282 = vmatpush1.msra.mxu0 %v124
    %283 = vmatprep.subr.mxu0 0.0
    %284 = vmatpush1.msra.mxu0 %v125
    %285 = vmatprep.subr.mxu0 0.0
    %286 = vmatpush1.msra.mxu0 %v126
    %287 = vmatprep.mubr.f32.mxu0 %v16
    %288 = vmatmul.mubr.f32.gmra.mrb[0].mxu0 %v15
    %v289 = vpop.f32.mrb[0].mxu0
    %v290 = vadd.f32 %v172, %v289
    %v291 = vpop.f32.mrb[0].mxu0
    %292 = vmatprep.mubr.f32.mxu0 %v21
    %293 = vmatmul.mubr.f32.gmra.mrb[0].mxu0 %v20
    %v294 = vpop.f32.mrb[0].mxu0
    %v295 = vadd.f32 %v172, %v294
    %v296 = vpop.f32.mrb[0].mxu0
    %297 = vmatprep.mubr.f32.mxu0 %v26
    %298 = vmatmul.mubr.f32.gmra.mrb[0].mxu0 %v25
    %v299 = vpop.f32.mrb[0].mxu0
    %v300 = vadd.f32 %v172, %v299
    %v301 = vpop.f32.mrb[0].mxu0
    %302 = vmatprep.mubr.f32.mxu0 %v31
    %303 = vmatmul.mubr.f32.gmra.mrb[0].mxu0 %v30
    %v304 = vpop.f32.mrb[0].mxu0
    %v305 = vadd.f32 %v172, %v304
    %v306 = vpop.f32.mrb[0].mxu0
    %307 = vmatprep.mubr.f32.mxu0 %v36
    %308 = vmatmul.mubr.f32.gmra.mrb[0].mxu0 %v35
    %v309 = vpop.f32.mrb[0].mxu0
    %v310 = vadd.f32 %v172, %v309
    %v311 = vpop.f32.mrb[0].mxu0
    %312 = vmatprep.mubr.f32.mxu0 %v41
    %313 = vmatmul.mubr.f32.gmra.mrb[0].mxu0 %v40
    %v314 = vpop.f32.mrb[0].mxu0
    %v315 = vadd.f32 %v172, %v314
    %v316 = vpop.f32.mrb[0].mxu0
    %317 = vmatprep.mubr.f32.mxu0 %v46
    %318 = vmatmul.mubr.f32.gmra.mrb[0].mxu0 %v45
    %v319 = vpop.f32.mrb[0].mxu0
    %v320 = vadd.f32 %v172, %v319
    %v321 = vpop.f32.mrb[0].mxu0
    %322 = vmatprep.mubr.f32.mxu0 %v51
    %323 = vmatmul.mubr.f32.gmra.mrb[0].mxu0 %v50
    %v324 = vpop.f32.mrb[0].mxu0
    %v325 = vadd.f32 %v172, %v324
    %v326 = vpop.f32.mrb[0].mxu0
    %327 = vmatprep.mubr.f32.mxu0 %v56
    %328 = vmatmul.mubr.f32.gmra.mrb[0].mxu0 %v55
    %v329 = vpop.f32.mrb[0].mxu0
    %v330 = vadd.f32 %v172, %v329
    %v331 = vpop.f32.mrb[0].mxu0
    %332 = vmatprep.mubr.f32.mxu0 %v61
    %333 = vmatmul.mubr.f32.gmra.mrb[0].mxu0 %v60
    %v334 = vpop.f32.mrb[0].mxu0
    %v335 = vadd.f32 %v172, %v334
    %v336 = vpop.f32.mrb[0].mxu0
    %337 = vmatprep.mubr.f32.mxu0 %v66
    %338 = vmatmul.mubr.f32.gmra.mrb[0].mxu0 %v65
    %v339 = vpop.f32.mrb[0].mxu0
    %v340 = vadd.f32 %v172, %v339
    %v341 = vpop.f32.mrb[0].mxu0
    %342 = vmatprep.mubr.f32.mxu0 %v71
    %343 = vmatmul.mubr.f32.gmra.mrb[0].mxu0 %v70
    %v344 = vpop.f32.mrb[0].mxu0
    %v345 = vadd.f32 %v172, %v344
    %v346 = vpop.f32.mrb[0].mxu0
    %347 = vmatprep.mubr.f32.mxu0 %v76
    %348 = vmatmul.mubr.f32.gmra.mrb[0].mxu0 %v75
    %v349 = vpop.f32.mrb[0].mxu0
    %v350 = vadd.f32 %v172, %v349
    %v351 = vpop.f32.mrb[0].mxu0
    %352 = vmatprep.mubr.f32.mxu0 %v81
    %353 = vmatmul.mubr.f32.gmra.mrb[0].mxu0 %v80
    %v354 = vpop.f32.mrb[0].mxu0
    %v355 = vadd.f32 %v172, %v354
    %v356 = vpop.f32.mrb[0].mxu0
    %357 = vmatprep.mubr.f32.mxu0 %v86
    %358 = vmatmul.mubr.f32.gmra.mrb[0].mxu0 %v85
    %v359 = vpop.f32.mrb[0].mxu0
    %v360 = vadd.f32 %v172, %v359
    %v361 = vpop.f32.mrb[0].mxu0
    %362 = vmatprep.mubr.f32.mxu0 %v91
    %363 = vmatmul.mubr.f32.gmra.mrb[0].mxu0 %v90
    %v364 = vpop.f32.mrb[0].mxu0
    %v365 = vadd.f32 %v172, %v364
    %v366 = vpop.f32.mrb[0].mxu0
    %367 = vdwg.mxu0
    %368 = vmatprep.subr.mxu0 0.0
    %369 = vmatpush1.msra.mxu0 %v127
    %370 = vmatprep.subr.mxu0 0.0
    %371 = vmatpush1.msra.mxu0 %v128
    %372 = vmatprep.subr.mxu0 0.0
    %373 = vmatpush1.msra.mxu0 %v129
    %374 = vmatprep.subr.mxu0 0.0
    %375 = vmatpush1.msra.mxu0 %v130
    %376 = vmatprep.subr.mxu0 0.0
    %377 = vmatpush1.msra.mxu0 %v131
    %378 = vmatprep.subr.mxu0 0.0
    %379 = vmatpush1.msra.mxu0 %v132
    %380 = vmatprep.subr.mxu0 0.0
    %381 = vmatpush1.msra.mxu0 %v133
    %382 = vmatprep.subr.mxu0 0.0
    %383 = vmatpush1.msra.mxu0 %v134
    %384 = vmatprep.subr.mxu0 0.0
    %385 = vmatpush1.msra.mxu0 %v135
    %386 = vmatprep.subr.mxu0 0.0
    %387 = vmatpush1.msra.mxu0 %v136
    %388 = vmatprep.subr.mxu0 0.0
    %389 = vmatpush1.msra.mxu0 %v137
    %390 = vmatprep.subr.mxu0 0.0
    %391 = vmatpush1.msra.mxu0 %v138
    %392 = vmatprep.subr.mxu0 0.0
    %393 = vmatpush1.msra.mxu0 %v139
    %394 = vmatprep.subr.mxu0 0.0
    %395 = vmatpush1.msra.mxu0 %v140
    %396 = vmatprep.subr.mxu0 0.0
    %397 = vmatpush1.msra.mxu0 %v141
    %398 = vmatprep.subr.mxu0 0.0
    %399 = vmatpush1.msra.mxu0 %v142
    %400 = vmatprep.subr.mxu0 0.0
    %401 = vmatpush1.msra.mxu0 %v143
    %402 = vmatprep.subr.mxu0 0.0
    %403 = vmatpush1.msra.mxu0 %v144
    %404 = vmatprep.subr.mxu0 0.0
    %405 = vmatpush1.msra.mxu0 %v145
    %406 = vmatprep.subr.mxu0 0.0
    %407 = vmatpush1.msra.mxu0 %v146
    %408 = vmatprep.subr.mxu0 0.0
    %409 = vmatpush1.msra.mxu0 %v147
    %410 = vmatprep.subr.mxu0 0.0
    %411 = vmatpush1.msra.mxu0 %v148
    %412 = vmatprep.subr.mxu0 0.0
    %413 = vmatpush1.msra.mxu0 %v149
    %414 = vmatprep.subr.mxu0 0.0
    %415 = vmatpush1.msra.mxu0 %v150
    %416 = vmatprep.subr.mxu0 0.0
    %417 = vmatpush1.msra.mxu0 %v151
    %418 = vmatprep.subr.mxu0 0.0
    %419 = vmatpush1.msra.mxu0 %v152
    %420 = vmatprep.subr.mxu0 0.0
    %421 = vmatpush1.msra.mxu0 %v153
    %422 = vmatprep.subr.mxu0 0.0
    %423 = vmatpush1.msra.mxu0 %v154
    %424 = vmatprep.subr.mxu0 0.0
    %425 = vmatpush1.msra.mxu0 %v155
    %426 = vmatprep.subr.mxu0 0.0
    %427 = vmatpush1.msra.mxu0 %v156
    %428 = vmatprep.subr.mxu0 0.0
    %429 = vmatpush1.msra.mxu0 %v157
    %430 = vmatprep.subr.mxu0 0.0
    %431 = vmatpush1.msra.mxu0 %v158
    %432 = vmatprep.mubr.f32.mxu0 %v18
    %433 = vmatmul.mubr.f32.gmra.mrb[0].mxu0 %v17
    %v434 = vpop.f32.mrb[0].mxu0
    %v435 = vadd.f32 %v290, %v434
    %v436 = vpop.f32.mrb[0].mxu0
    %437 = vmatprep.mubr.f32.mxu0 %v23
    %438 = vmatmul.mubr.f32.gmra.mrb[0].mxu0 %v22
    %v439 = vpop.f32.mrb[0].mxu0
    %v440 = vadd.f32 %v295, %v439
    %v441 = vpop.f32.mrb[0].mxu0
    %442 = vmatprep.mubr.f32.mxu0 %v28
    %443 = vmatmul.mubr.f32.gmra.mrb[0].mxu0 %v27
    %v444 = vpop.f32.mrb[0].mxu0
    %v445 = vadd.f32 %v300, %v444
    %v446 = vpop.f32.mrb[0].mxu0
    %447 = vmatprep.mubr.f32.mxu0 %v33
    %448 = vmatmul.mubr.f32.gmra.mrb[0].mxu0 %v32
    %v449 = vpop.f32.mrb[0].mxu0
    %v450 = vadd.f32 %v305, %v449
    %v451 = vpop.f32.mrb[0].mxu0
    %452 = vmatprep.mubr.f32.mxu0 %v38
    %453 = vmatmul.mubr.f32.gmra.mrb[0].mxu0 %v37
    %v454 = vpop.f32.mrb[0].mxu0
    %v455 = vadd.f32 %v310, %v454
    %v456 = vpop.f32.mrb[0].mxu0
    %457 = vmatprep.mubr.f32.mxu0 %v43
    %458 = vmatmul.mubr.f32.gmra.mrb[0].mxu0 %v42
    %v459 = vpop.f32.mrb[0].mxu0
    %v460 = vadd.f32 %v315, %v459
    %v461 = vpop.f32.mrb[0].mxu0
    %462 = vmatprep.mubr.f32.mxu0 %v48
    %463 = vmatmul.mubr.f32.gmra.mrb[0].mxu0 %v47
    %v464 = vpop.f32.mrb[0].mxu0
    %v465 = vadd.f32 %v320, %v464
    %v466 = vpop.f32.mrb[0].mxu0
    %467 = vmatprep.mubr.f32.mxu0 %v53
    %468 = vmatmul.mubr.f32.gmra.mrb[0].mxu0 %v52
    %v469 = vpop.f32.mrb[0].mxu0
    %v470 = vadd.f32 %v325, %v469
    %v471 = vpop.f32.mrb[0].mxu0
    %472 = vmatprep.mubr.f32.mxu0 %v58
    %473 = vmatmul.mubr.f32.gmra.mrb[0].mxu0 %v57
    %v474 = vpop.f32.mrb[0].mxu0
    %v475 = vadd.f32 %v330, %v474
    %v476 = vpop.f32.mrb[0].mxu0
    %477 = vmatprep.mubr.f32.mxu0 %v63
    %478 = vmatmul.mubr.f32.gmra.mrb[0].mxu0 %v62
    %v479 = vpop.f32.mrb[0].mxu0
    %v480 = vadd.f32 %v335, %v479
    %v481 = vpop.f32.mrb[0].mxu0
    %482 = vmatprep.mubr.f32.mxu0 %v68
    %483 = vmatmul.mubr.f32.gmra.mrb[0].mxu0 %v67
    %v484 = vpop.f32.mrb[0].mxu0
    %v485 = vadd.f32 %v340, %v484
    %v486 = vpop.f32.mrb[0].mxu0
    %487 = vmatprep.mubr.f32.mxu0 %v73
    %488 = vmatmul.mubr.f32.gmra.mrb[0].mxu0 %v72
    %v489 = vpop.f32.mrb[0].mxu0
    %v490 = vadd.f32 %v345, %v489
    %v491 = vpop.f32.mrb[0].mxu0
    %492 = vmatprep.mubr.f32.mxu0 %v78
    %493 = vmatmul.mubr.f32.gmra.mrb[0].mxu0 %v77
    %v494 = vpop.f32.mrb[0].mxu0
    %v495 = vadd.f32 %v350, %v494
    %v496 = vpop.f32.mrb[0].mxu0
    %497 = vmatprep.mubr.f32.mxu0 %v83
    %498 = vmatmul.mubr.f32.gmra.mrb[0].mxu0 %v82
    %v499 = vpop.f32.mrb[0].mxu0
    %v500 = vadd.f32 %v355, %v499
    %v501 = vpop.f32.mrb[0].mxu0
    %502 = vmatprep.mubr.f32.mxu0 %v88
    %503 = vmatmul.mubr.f32.gmra.mrb[0].mxu0 %v87
    %v504 = vpop.f32.mrb[0].mxu0
    %v505 = vadd.f32 %v360, %v504
    %v506 = vpop.f32.mrb[0].mxu0
    %507 = vmatprep.mubr.f32.mxu0 %v93
    %508 = vmatmul.mubr.f32.gmra.mrb[0].mxu0 %v92
    %v509 = vpop.f32.mrb[0].mxu0
    %v510 = vadd.f32 %v365, %v509
    %v511 = vpop.f32.mrb[0].mxu0
    %512 = vdwg.mxu0
    %513 = vmatprep.subr.mxu0 0.0
    %514 = vmatpush1.msra.mxu0 %v159
    %515 = vmatprep.subr.mxu0 0.0
    %516 = vmatpush1.msra.mxu0 %v160
    %517 = vmatprep.subr.mxu0 0.0
    %518 = vmatpush1.msra.mxu0 %v161
    %519 = vmatprep.subr.mxu0 0.0
    %520 = vmatpush1.msra.mxu0 %v162
    %521 = vmatprep.subr.mxu0 0.0
    %522 = vmatpush1.msra.mxu0 %v163
    %523 = vmatprep.subr.mxu0 0.0
    %524 = vmatpush1.msra.mxu0 %v164
    %525 = vmatprep.subr.mxu0 0.0
    %526 = vmatpush1.msra.mxu0 %v165
    %527 = vmatprep.subr.mxu0 0.0
    %528 = vmatpush1.msra.mxu0 %v166
    %529 = vmatprep.subr.mxu0 0.0
    %530 = vmatpush1.msra.mxu0 0.0
    %531 = vmatprep.subr.mxu0 0.0
    %532 = vmatpush1.msra.mxu0 0.0
    %533 = vmatprep.subr.mxu0 0.0
    %534 = vmatpush1.msra.mxu0 0.0
    %535 = vmatprep.subr.mxu0 0.0
    %536 = vmatpush1.msra.mxu0 0.0
    %537 = vmatprep.subr.mxu0 0.0
    %538 = vmatpush1.msra.mxu0 0.0
    %539 = vmatprep.subr.mxu0 0.0
    %540 = vmatpush1.msra.mxu0 0.0
    %541 = vmatprep.subr.mxu0 0.0
    %542 = vmatpush1.msra.mxu0 0.0
    %543 = vmatprep.subr.mxu0 0.0
    %544 = vmatpush1.msra.mxu0 0.0
    %545 = vmatprep.subr.mxu0 0.0
    %546 = vmatpush1.msra.mxu0 0.0
    %547 = vmatprep.subr.mxu0 0.0
    %548 = vmatpush1.msra.mxu0 0.0
    %549 = vmatprep.subr.mxu0 0.0
    %550 = vmatpush1.msra.mxu0 0.0
    %551 = vmatprep.subr.mxu0 0.0
    %552 = vmatpush1.msra.mxu0 0.0
    %553 = vmatprep.subr.mxu0 0.0
    %554 = vmatpush1.msra.mxu0 0.0
    %555 = vmatprep.subr.mxu0 0.0
    %556 = vmatpush1.msra.mxu0 0.0
    %557 = vmatprep.subr.mxu0 0.0
    %558 = vmatpush1.msra.mxu0 0.0
    %559 = vmatprep.subr.mxu0 0.0
    %560 = vmatpush1.msra.mxu0 0.0
    %561 = vmatprep.subr.mxu0 0.0
    %562 = vmatpush1.msra.mxu0 0.0
    %563 = vmatprep.subr.mxu0 0.0
    %564 = vmatpush1.msra.mxu0 0.0
    %565 = vmatprep.subr.mxu0 0.0
    %566 = vmatpush1.msra.mxu0 0.0
    %567 = vmatprep.subr.mxu0 0.0
    %568 = vmatpush1.msra.mxu0 0.0
    %569 = vmatprep.subr.mxu0 0.0
    %570 = vmatpush1.msra.mxu0 0.0
    %571 = vmatprep.subr.mxu0 0.0
    %572 = vmatpush1.msra.mxu0 0.0
    %573 = vmatprep.subr.mxu0 0.0
    %574 = vmatpush1.msra.mxu0 0.0
    %575 = vmatprep.subr.mxu0 0.0
    %576 = vmatpush1.msra.mxu0 0.0
    %577 = vmatprep.mubr.f32.mxu0 0.0
    %578 = vmatmul.mubr.f32.gmra.mrb[0].mxu0 %v176
    %v579 = vpop.f32.mrb[0].mxu0
    %v580 = vadd.f32 %v435, %v579
    %v581 = vpop.f32.mrb[0].mxu0
    %582 = vmatprep.mubr.f32.mxu0 0.0
    %583 = vmatmul.mubr.f32.gmra.mrb[0].mxu0 %v179
    %v584 = vpop.f32.mrb[0].mxu0
    %v585 = vadd.f32 %v440, %v584
    %v586 = vpop.f32.mrb[0].mxu0
    %587 = vmatprep.mubr.f32.mxu0 0.0
    %588 = vmatmul.mubr.f32.gmra.mrb[0].mxu0 %v182
    %v589 = vpop.f32.mrb[0].mxu0
    %v590 = vadd.f32 %v445, %v589
    %v591 = vpop.f32.mrb[0].mxu0
    %592 = vmatprep.mubr.f32.mxu0 0.0
    %593 = vmatmul.mubr.f32.gmra.mrb[0].mxu0 %v185
    %v594 = vpop.f32.mrb[0].mxu0
    %v595 = vadd.f32 %v450, %v594
    %v596 = vpop.f32.mrb[0].mxu0
    %597 = vmatprep.mubr.f32.mxu0 0.0
    %598 = vmatmul.mubr.f32.gmra.mrb[0].mxu0 %v188
    %v599 = vpop.f32.mrb[0].mxu0
    %v600 = vadd.f32 %v455, %v599
    %v601 = vpop.f32.mrb[0].mxu0
    %602 = vmatprep.mubr.f32.mxu0 0.0
    %603 = vmatmul.mubr.f32.gmra.mrb[0].mxu0 %v191
    %v604 = vpop.f32.mrb[0].mxu0
    %v605 = vadd.f32 %v460, %v604
    %v606 = vpop.f32.mrb[0].mxu0
    %607 = vmatprep.mubr.f32.mxu0 0.0
    %608 = vmatmul.mubr.f32.gmra.mrb[0].mxu0 %v194
    %v609 = vpop.f32.mrb[0].mxu0
    %v610 = vadd.f32 %v465, %v609
    %v611 = vpop.f32.mrb[0].mxu0
    %612 = vmatprep.mubr.f32.mxu0 0.0
    %613 = vmatmul.mubr.f32.gmra.mrb[0].mxu0 %v197
    %v614 = vpop.f32.mrb[0].mxu0
    %v615 = vadd.f32 %v470, %v614
    %v616 = vpop.f32.mrb[0].mxu0
    %617 = vmatprep.mubr.f32.mxu0 0.0
    %618 = vmatmul.mubr.f32.gmra.mrb[0].mxu0 %v200
    %v619 = vpop.f32.mrb[0].mxu0
    %v620 = vadd.f32 %v475, %v619
    %v621 = vpop.f32.mrb[0].mxu0
    %622 = vmatprep.mubr.f32.mxu0 0.0
    %623 = vmatmul.mubr.f32.gmra.mrb[0].mxu0 %v203
    %v624 = vpop.f32.mrb[0].mxu0
    %v625 = vadd.f32 %v480, %v624
    %v626 = vpop.f32.mrb[0].mxu0
    %627 = vmatprep.mubr.f32.mxu0 0.0
    %628 = vmatmul.mubr.f32.gmra.mrb[0].mxu0 %v206
    %v629 = vpop.f32.mrb[0].mxu0
    %v630 = vadd.f32 %v485, %v629
    %v631 = vpop.f32.mrb[0].mxu0
    %632 = vmatprep.mubr.f32.mxu0 0.0
    %633 = vmatmul.mubr.f32.gmra.mrb[0].mxu0 %v209
    %v634 = vpop.f32.mrb[0].mxu0
    %v635 = vadd.f32 %v490, %v634
    %v636 = vpop.f32.mrb[0].mxu0
    %637 = vmatprep.mubr.f32.mxu0 0.0
    %638 = vmatmul.mubr.f32.gmra.mrb[0].mxu0 %v212
    %v639 = vpop.f32.mrb[0].mxu0
    %v640 = vadd.f32 %v495, %v639
    %v641 = vpop.f32.mrb[0].mxu0
    %642 = vmatprep.mubr.f32.mxu0 0.0
    %643 = vmatmul.mubr.f32.gmra.mrb[0].mxu0 %v215
    %v644 = vpop.f32.mrb[0].mxu0
    %v645 = vadd.f32 %v500, %v644
    %v646 = vpop.f32.mrb[0].mxu0
    %647 = vmatprep.mubr.f32.mxu0 0.0
    %648 = vmatmul.mubr.f32.gmra.mrb[0].mxu0 %v218
    %v649 = vpop.f32.mrb[0].mxu0
    %v650 = vadd.f32 %v505, %v649
    %v651 = vpop.f32.mrb[0].mxu0
    %652 = vmatprep.mubr.f32.mxu0 0.0
    %653 = vmatmul.mubr.f32.gmra.mrb[0].mxu0 %v221
    %v654 = vpop.f32.mrb[0].mxu0
    %v655 = vadd.f32 %v510, %v654
    %v656 = vpop.f32.mrb[0].mxu0
    %657 = vdwg.mxu0
    %658 = vst [vmem:[#allocation2] sm:$0xff] %v580
    %659 = vst [vmem:[#allocation2 + $0x8] sm:$0xff] %v585
    %660 = vst [vmem:[#allocation2 + $0x10] sm:$0xff] %v590
    %661 = vst [vmem:[#allocation2 + $0x18] sm:$0xff] %v595
    %662 = vst [vmem:[#allocation2 + $0x20] sm:$0xff] %v600
    %663 = vst [vmem:[#allocation2 + $0x28] sm:$0xff] %v605
    %664 = vst [vmem:[#allocation2 + $0x30] sm:$0xff] %v610
    %665 = vst [vmem:[#allocation2 + $0x38] sm:$0xff] %v615
    %666 = vst [vmem:[#allocation2 + $0x40] sm:$0xff] %v620
    %667 = vst [vmem:[#allocation2 + $0x48] sm:$0xff] %v625
    %668 = vst [vmem:[#allocation2 + $0x50] sm:$0xff] %v630
    %669 = vst [vmem:[#allocation2 + $0x58] sm:$0xff] %v635
    %670 = vst [vmem:[#allocation2 + $0x60] sm:$0xff] %v640
    %671 = vst [vmem:[#allocation2 + $0x68] sm:$0xff] %v645
    %672 = vst [vmem:[#allocation2 + $0x70] sm:$0xff] %v650
    %673 = vst [vmem:[#allocation2 + $0x78] sm:$0xff] %v655
    // Predicated region
    $region14: #{tpu_custom_call.1} parent=1 // pred_check
      _
    $region15: #{tpu_custom_call.1} parent=1 // pred_check_branch
      %675 = sbr.rel (0) target = $region17
    $region16: #{tpu_custom_call.1} parent=1 // pred_region
      %s677 = ssub.s32 2048, 2048
      %678 = vsyncadd [#allocation3], %s677
      %s679 = sshll.u32 [#allocation2], 4
      %s680 = int_to_ptr.vmem [resolvable:$true] %s679
      %685 = dma.vmem_to_hbm [thread:$0]  %s680, 2048, %s3, [#allocation3], 128, 128, 8
    $region17: #{tpu_custom_call.1} parent=1 // pred_fallthru
      _
    // Predicated region
    $region18: #{tpu_custom_call.1} parent=1 // pred_check
      _
    $region19: #{tpu_custom_call.1} parent=1 // pred_check_branch
      %687 = sbr.rel (0) target = $region21
    $region20: #{tpu_custom_call.1} parent=1 // pred_region
      %688 = dma.done [#allocation3], 2048
    $region21: #{tpu_custom_call.1} parent=1 // pred_fallthru
      _
    %689 = vsyncpa [#allocation3], 1

</llo_original>
